<compile_context>
chip_gen: v7x
topology: tpu7x:2x2x1
jax: 0.10.0
libtpu: 0.0.40
codegen_flags: <defaults>
</compile_context>

<pallas_src>
import functools

import jax
import jax.numpy as jnp
from jax.experimental import pallas as pl
from jax.experimental.pallas import tpu as pltpu

IN_FEATURES = 11


def _mlp_kernel(*refs, num_hidden: int):
    """Fused MLP forward for one batch tile (feature-major activations).

    refs = (x_ref, w0, b0, w1, b1, ..., w_last, b_last, o_ref)
      x_ref:  [TB, 11]                     (batch-major, as supplied)
      w_i:    [out, in]  (PyTorch layout)  b_i:    [out, 1]
      w_last: [1, width]                   b_last: [1, 1]
      o_ref:  [1, TB]                      (batch along lanes)
    """
    x_ref = refs[0]
    o_ref = refs[-1]
    params = refs[1:-1]

    # Layer 0: contract the feature axis of W [width, 11] with the feature axis
    # of X [TB, 11]  ->  h [width, TB]  (batch ends up on the lane axis).
    h = jax.lax.dot_general(
        params[0][...], x_ref[...],
        dimension_numbers=(((1,), (1,)), ((), ())),
        preferred_element_type=jnp.float32)
    h = jnp.maximum(h + params[1][...], 0.0)

    # Hidden layers: [width, width] @ [width, TB] on the MXU, bias+ReLU on VPU.
    for i in range(1, num_hidden):
        w = params[2 * i][...]
        b = params[2 * i + 1][...]
        h = jnp.dot(w, h, preferred_element_type=jnp.float32)
        h = jnp.maximum(h + b, 0.0)

    # Final Linear(width, 1): [1, width] @ [width, TB] -> lane-dense [1, TB].
    w_last = params[-2][...]
    b_last = params[-1][...]
    y = jnp.dot(w_last, h, preferred_element_type=jnp.float32) + b_last
    o_ref[...] = y.astype(o_ref.dtype)


def init_feedforward_params(key, width: int, depth: int):
    """Deterministic params mimicking torch.nn.Linear default init.

    Layer dims: 11 -> width, (depth-1) x (width -> width), width -> 1.
    Stored in kernel-ready layout (native PyTorch [out, in] weights):
      W_i: [out, in],  b_i: [out, 1]   (bias as a column -> lane broadcast)
    Returned as a flat list [w0, b0, w1, b1, ..., w_last, b_last].
    """
    dims = [(IN_FEATURES, width)] + [(width, width)] * (depth - 1) + [(width, 1)]
    flat = []
    for fan_in, fan_out in dims:
        key, kw, kb = jax.random.split(key, 3)
        bound = 1.0 / float(fan_in) ** 0.5
        w = jax.random.uniform(kw, (fan_out, fan_in), jnp.float32, -bound, bound)
        b = jax.random.uniform(kb, (fan_out,), jnp.float32, -bound, bound)
        flat.append(w)                       # [out, in]
        flat.append(b.reshape(fan_out, 1))   # [out, 1]
    return flat


def feedforward_forward(params, x, *, block_batch: int = 4096):
    """Fused forward pass matching the PyTorch Sequential semantics.

    x: [B, 11] float32 -> [B, 1] float32.
    """
    batch, in_dim = x.shape
    num_hidden = len(params) // 2 - 1  # number of Linear+ReLU layers

    # Batch tiling: whole batch if small, else lane-aligned tiles (pad + slice).
    if batch <= block_batch:
        tb = batch
        padded = batch
    else:
        tb = max(128, (block_batch // 128) * 128)
        padded = pl.cdiv(batch, tb) * tb
    if padded != batch:
        x = jnp.pad(x, ((0, padded - batch), (0, 0)))
    grid = (padded // tb,)

    # Activations are gridded over batch; weights/biases are whole-array and
    # stay resident in VMEM across all batch tiles (constant index_map).
    in_specs = [pl.BlockSpec((tb, in_dim), lambda i: (i, 0))]
    for p in params:
        in_specs.append(pl.BlockSpec(p.shape, lambda i: (0, 0)))
    # Output is a [1, padded] row (batch along lanes) -> dense lane stores.
    out_specs = pl.BlockSpec((1, tb), lambda i: (0, i))

    out = pl.pallas_call(
        functools.partial(_mlp_kernel, num_hidden=num_hidden),
        out_shape=jax.ShapeDtypeStruct((1, padded), x.dtype),
        grid=grid,
        in_specs=in_specs,
        out_specs=out_specs,
        compiler_params=pltpu.CompilerParams(
            dimension_semantics=("parallel",)),
    )(x, *params)

    out = out.reshape(padded, 1)
    if padded != batch:
        out = out[:batch]
    return out


def _ref_forward(params, x):
    """Pure-JAX reference (same math, no Pallas)."""
    num_hidden = len(params) // 2 - 1
    h = x
    for i in range(num_hidden):
        w, b = params[2 * i], params[2 * i + 1]
        h = jnp.maximum(h @ w.T + b.T, 0.0)
    w_last, b_last = params[-2], params[-1]
    return h @ w_last.T + b_last.T


if __name__ == "__main__":
    config = {"hidden_layer_width": 32, "depth": 3}

    key = jax.random.PRNGKey(0)
    key, kx = jax.random.split(key)
    params = init_feedforward_params(key, config["hidden_layer_width"],
                                     config["depth"])

    # Small single-tile batch.
    x = jax.random.normal(kx, (8, IN_FEATURES), jnp.float32)
    out = jax.block_until_ready(feedforward_forward(params, x))
    assert out.shape == (8, 1), out.shape
    ref = _ref_forward(params, x)
    assert jnp.allclose(out, ref, atol=1e-5, rtol=1e-5), "mismatch vs reference"

    # Multi-tile path (tiling + padding + slicing), still small.
    key, kx2 = jax.random.split(key)
    x2 = jax.random.normal(kx2, (200, IN_FEATURES), jnp.float32)
    out2 = jax.block_until_ready(
        feedforward_forward(params, x2, block_batch=128))
    assert out2.shape == (200, 1), out2.shape
    ref2 = _ref_forward(params, x2)
    assert jnp.allclose(out2, ref2, atol=1e-5, rtol=1e-5), \
        "mismatch vs reference (tiled)"

    print("KERNEL_OK")
</pallas_src>

<mosaic_0001>
module attributes {stable_mosaic.version = 11 : i64} {
  func.func @_mlp_kernel(%arg0: i32, %arg1: memref<8x11xf32, #tpu.memory_space<vmem>>, %arg2: memref<32x11xf32, #tpu.memory_space<vmem>>, %arg3: memref<32x1xf32, #tpu.memory_space<vmem>>, %arg4: memref<32x32xf32, #tpu.memory_space<vmem>>, %arg5: memref<32x1xf32, #tpu.memory_space<vmem>>, %arg6: memref<32x32xf32, #tpu.memory_space<vmem>>, %arg7: memref<32x1xf32, #tpu.memory_space<vmem>>, %arg8: memref<1x32xf32, #tpu.memory_space<vmem>>, %arg9: memref<1x1xf32, #tpu.memory_space<vmem>>, %arg10: memref<1x8xf32, #tpu.memory_space<vmem>>) attributes {dimension_semantics = [#tpu.dimension_semantics<parallel>], iteration_bounds = array<i64: 1>, scalar_prefetch = 0 : i64, scratch_operands = 0 : i64, tpu.core_type = #tpu.core_type<tc>, window_params = [{transform_indices = @transform_0, window_bounds = array<i64: 8, 11>}, {pipeline_mode = #tpu.pipeline_mode<synchronous>, transform_indices = @transform_1, window_bounds = array<i64: 32, 11>}, {pipeline_mode = #tpu.pipeline_mode<synchronous>, transform_indices = @transform_2, window_bounds = array<i64: 32, 1>}, {pipeline_mode = #tpu.pipeline_mode<synchronous>, transform_indices = @transform_3, window_bounds = array<i64: 32, 32>}, {pipeline_mode = #tpu.pipeline_mode<synchronous>, transform_indices = @transform_4, window_bounds = array<i64: 32, 1>}, {pipeline_mode = #tpu.pipeline_mode<synchronous>, transform_indices = @transform_5, window_bounds = array<i64: 32, 32>}, {pipeline_mode = #tpu.pipeline_mode<synchronous>, transform_indices = @transform_6, window_bounds = array<i64: 32, 1>}, {pipeline_mode = #tpu.pipeline_mode<synchronous>, transform_indices = @transform_7, window_bounds = array<i64: 1, 32>}, {pipeline_mode = #tpu.pipeline_mode<synchronous>, transform_indices = @transform_8, window_bounds = array<i64: 1, 1>}, {transform_indices = @transform_9, window_bounds = array<i64: 1, 8>}]} {
    %c0 = arith.constant 0 : index
    %c0_0 = arith.constant 0 : index
    %0 = vector.load %arg2[%c0, %c0_0] : memref<32x11xf32, #tpu.memory_space<vmem>>, vector<32x11xf32>
    %c0_1 = arith.constant 0 : index
    %c0_2 = arith.constant 0 : index
    %1 = vector.load %arg1[%c0_1, %c0_2] : memref<8x11xf32, #tpu.memory_space<vmem>>, vector<8x11xf32>
    %cst = arith.constant dense<0.000000e+00> : vector<32x8xf32>
    %2 = tpu.matmul %0, %1, %cst {dimension_numbers = #tpu.dot_dimension_numbers<[1], [1], [0], [0], [0, 0, 1, 0], [], []>} : vector<32x11xf32>, vector<8x11xf32>, vector<32x8xf32> -> vector<32x8xf32>
    %c0_3 = arith.constant 0 : index
    %c0_4 = arith.constant 0 : index
    %3 = vector.load %arg3[%c0_3, %c0_4] : memref<32x1xf32, #tpu.memory_space<vmem>>, vector<32x1xf32>
    %4 = vector.broadcast %3 : vector<32x1xf32> to vector<32x8xf32>
    %5 = arith.addf %2, %4 : vector<32x8xf32>
    %cst_5 = arith.constant 0.000000e+00 : f32
    %6 = vector.broadcast %cst_5 : f32 to vector<32x8xf32>
    %7 = arith.maximumf %5, %6 : vector<32x8xf32>
    %c0_6 = arith.constant 0 : index
    %c0_7 = arith.constant 0 : index
    %8 = vector.load %arg4[%c0_6, %c0_7] : memref<32x32xf32, #tpu.memory_space<vmem>>, vector<32x32xf32>
    %c0_8 = arith.constant 0 : index
    %c0_9 = arith.constant 0 : index
    %9 = vector.load %arg5[%c0_8, %c0_9] : memref<32x1xf32, #tpu.memory_space<vmem>>, vector<32x1xf32>
    %cst_10 = arith.constant dense<0.000000e+00> : vector<32x8xf32>
    %10 = tpu.matmul %8, %7, %cst_10 {dimension_numbers = #tpu.dot_dimension_numbers<[1], [0], [0], [1], [0, 0, 1, 1], [], []>} : vector<32x32xf32>, vector<32x8xf32>, vector<32x8xf32> -> vector<32x8xf32>
    %11 = vector.broadcast %9 : vector<32x1xf32> to vector<32x8xf32>
    %12 = arith.addf %10, %11 : vector<32x8xf32>
    %cst_11 = arith.constant 0.000000e+00 : f32
    %13 = vector.broadcast %cst_11 : f32 to vector<32x8xf32>
    %14 = arith.maximumf %12, %13 : vector<32x8xf32>
    %c0_12 = arith.constant 0 : index
    %c0_13 = arith.constant 0 : index
    %15 = vector.load %arg6[%c0_12, %c0_13] : memref<32x32xf32, #tpu.memory_space<vmem>>, vector<32x32xf32>
    %c0_14 = arith.constant 0 : index
    %c0_15 = arith.constant 0 : index
    %16 = vector.load %arg7[%c0_14, %c0_15] : memref<32x1xf32, #tpu.memory_space<vmem>>, vector<32x1xf32>
    %cst_16 = arith.constant dense<0.000000e+00> : vector<32x8xf32>
    %17 = tpu.matmul %15, %14, %cst_16 {dimension_numbers = #tpu.dot_dimension_numbers<[1], [0], [0], [1], [0, 0, 1, 1], [], []>} : vector<32x32xf32>, vector<32x8xf32>, vector<32x8xf32> -> vector<32x8xf32>
    %18 = vector.broadcast %16 : vector<32x1xf32> to vector<32x8xf32>
    %19 = arith.addf %17, %18 : vector<32x8xf32>
    %cst_17 = arith.constant 0.000000e+00 : f32
    %20 = vector.broadcast %cst_17 : f32 to vector<32x8xf32>
    %21 = arith.maximumf %19, %20 : vector<32x8xf32>
    %c0_18 = arith.constant 0 : index
    %c0_19 = arith.constant 0 : index
    %22 = vector.load %arg8[%c0_18, %c0_19] : memref<1x32xf32, #tpu.memory_space<vmem>>, vector<1x32xf32>
    %c0_20 = arith.constant 0 : index
    %c0_21 = arith.constant 0 : index
    %23 = vector.load %arg9[%c0_20, %c0_21] : memref<1x1xf32, #tpu.memory_space<vmem>>, vector<1x1xf32>
    %cst_22 = arith.constant dense<0.000000e+00> : vector<1x8xf32>
    %24 = tpu.matmul %22, %21, %cst_22 {dimension_numbers = #tpu.dot_dimension_numbers<[1], [0], [0], [1], [0, 0, 1, 1], [], []>} : vector<1x32xf32>, vector<32x8xf32>, vector<1x8xf32> -> vector<1x8xf32>
    %25 = vector.broadcast %23 : vector<1x1xf32> to vector<1x8xf32>
    %26 = arith.addf %24, %25 : vector<1x8xf32>
    %c0_23 = arith.constant 0 : index
    %c0_24 = arith.constant 0 : index
    %27 = vector.load %arg10[%c0_23, %c0_24] : memref<1x8xf32, #tpu.memory_space<vmem>>, vector<1x8xf32>
    tpu.vector_store %arg10[%c0_23, %c0_24], %26 {strides = array<i32>} : memref<1x8xf32, #tpu.memory_space<vmem>>, vector<1x8xf32>,
    return
  }
  func.func @transform_0(%arg0: i32) -> (i32, i32) {
    %c0_i32 = arith.constant 0 : i32
    %c0_i32_0 = arith.constant 0 : i32
    return %arg0, %c0_i32 : i32, i32
  }
  func.func @transform_1(%arg0: i32) -> (i32, i32) {
    %c0_i32 = arith.constant 0 : i32
    %c0_i32_0 = arith.constant 0 : i32
    %c0_i32_1 = arith.constant 0 : i32
    return %c0_i32, %c0_i32_0 : i32, i32
  }
  func.func @transform_2(%arg0: i32) -> (i32, i32) {
    %c0_i32 = arith.constant 0 : i32
    %c0_i32_0 = arith.constant 0 : i32
    %c0_i32_1 = arith.constant 0 : i32
    return %c0_i32, %c0_i32_0 : i32, i32
  }
  func.func @transform_3(%arg0: i32) -> (i32, i32) {
    %c0_i32 = arith.constant 0 : i32
    %c0_i32_0 = arith.constant 0 : i32
    %c0_i32_1 = arith.constant 0 : i32
    return %c0_i32, %c0_i32_0 : i32, i32
  }
  func.func @transform_4(%arg0: i32) -> (i32, i32) {
    %c0_i32 = arith.constant 0 : i32
    %c0_i32_0 = arith.constant 0 : i32
    %c0_i32_1 = arith.constant 0 : i32
    return %c0_i32, %c0_i32_0 : i32, i32
  }
  func.func @transform_5(%arg0: i32) -> (i32, i32) {
    %c0_i32 = arith.constant 0 : i32
    %c0_i32_0 = arith.constant 0 : i32
    %c0_i32_1 = arith.constant 0 : i32
    return %c0_i32, %c0_i32_0 : i32, i32
  }
  func.func @transform_6(%arg0: i32) -> (i32, i32) {
    %c0_i32 = arith.constant 0 : i32
    %c0_i32_0 = arith.constant 0 : i32
    %c0_i32_1 = arith.constant 0 : i32
    return %c0_i32, %c0_i32_0 : i32, i32
  }
  func.func @transform_7(%arg0: i32) -> (i32, i32) {
    %c0_i32 = arith.constant 0 : i32
    %c0_i32_0 = arith.constant 0 : i32
    %c0_i32_1 = arith.constant 0 : i32
    return %c0_i32, %c0_i32_0 : i32, i32
  }
  func.func @transform_8(%arg0: i32) -> (i32, i32) {
    %c0_i32 = arith.constant 0 : i32
    %c0_i32_0 = arith.constant 0 : i32
    %c0_i32_1 = arith.constant 0 : i32
    return %c0_i32, %c0_i32_0 : i32, i32
  }
  func.func @transform_9(%arg0: i32) -> (i32, i32) {
    %c0_i32 = arith.constant 0 : i32
    %c0_i32_0 = arith.constant 0 : i32
    return %c0_i32, %arg0 : i32, i32
  }
}

</mosaic_0001>

<llo_original>
// kernel: tpu_custom_call.1
$region0: #{tpu_custom_call.1}
  #allocation0 [shape = 'u32[]', space=smem, size = 0x4, offset = 0x4, fixed_abs, tag = 'smem constant byte address 0x4 - core index']
  #allocation1 [shape = 'u32[144,128]{1,0:T(1,128)}', space=vmem, size = 0x12000, scoped, tag = 'internal scratch']
  #allocation2 [shape = 'f32[1,1]{1,0:T(1,128)S(1)}', space=vmem, size = 0x200, scoped, tag = 'scoped memory for tpu_custom_call.1']
  %s0 = inlined_call_operand.vmem [shape: f32[8,11], index: 0, kind: input, shape index: {}]
  %s1 = inlined_call_operand.vmem [shape: f32[32,11], index: 1, kind: input, shape index: {}]
  %s2 = inlined_call_operand.vmem [shape: f32[32,1], index: 2, kind: input, shape index: {}]
  %s3 = inlined_call_operand.vmem [shape: f32[32,32], index: 3, kind: input, shape index: {}]
  %s4 = inlined_call_operand.vmem [shape: f32[32,1], index: 4, kind: input, shape index: {}]
  %s5 = inlined_call_operand.vmem [shape: f32[32,32], index: 5, kind: input, shape index: {}]
  %s6 = inlined_call_operand.vmem [shape: f32[32,1], index: 6, kind: input, shape index: {}]
  %s7 = inlined_call_operand.vmem [shape: f32[1,32], index: 7, kind: input, shape index: {}]
  %s8 = inlined_call_operand.<no memory space> [shape: f32[1,1], index: 8, kind: input, shape index: {}]
  %s9 = inlined_call_operand.hbm [shape: f32[1,8], index: 9, kind: output, shape index: {}]
  %s10 = sld [smem:[#allocation0]]
  $region46: #{tpu_custom_call.1} parent=0
    _
  %s12 = ssub.s32 1, %s10
  %s13 = scalar_select 0, %s12, %s10
  %v14 = vstv %s8
  %15 = vst [vmem:[#allocation2] sm:$0x1] %v14
  $region1: #{tpu_custom_call.1} parent=0
    #allocation3 [shape = 'u8[512]{0}', space=vmem, size = 0x400, scoped, tag = 'output window, operand 0, single buffered']
    #allocation4 [shape = 's32[1]{0}', space=sflag, size = 0x4, scoped, tag = 'scoped memory for tpu_custom_call.1']
    %16 = vsyncpa [#allocation4], 0
    // Predicated region
    $region2: #{tpu_custom_call.1} parent=1 // pred_check
      _
    $region3: #{tpu_custom_call.1} parent=1 // pred_check_branch
      %18 = sbr.rel (0) target = $region5
    $region4: #{tpu_custom_call.1} parent=1 // pred_region
      _
    $region5: #{tpu_custom_call.1} parent=1 // pred_fallthru
      _
    // Predicated region
    $region6: #{tpu_custom_call.1} parent=1 // pred_check
      _
    $region7: #{tpu_custom_call.1} parent=1 // pred_check_branch
      %20 = sbr.rel (0) target = $region9
    $region8: #{tpu_custom_call.1} parent=1 // pred_region
      _
    $region9: #{tpu_custom_call.1} parent=1 // pred_fallthru
      _
    // Predicated region
    $region10: #{tpu_custom_call.1} parent=1 // pred_check
      _
    $region11: #{tpu_custom_call.1} parent=1 // pred_check_branch
      %22 = sbr.rel (0) target = $region13
    $region12: #{tpu_custom_call.1} parent=1 // pred_region
      _
    $region13: #{tpu_custom_call.1} parent=1 // pred_fallthru
      _
    // Predicated region
    $region14: #{tpu_custom_call.1} parent=1 // pred_check
      _
    $region15: #{tpu_custom_call.1} parent=1 // pred_check_branch
      %24 = sbr.rel (0) target = $region17
    $region16: #{tpu_custom_call.1} parent=1 // pred_region
      _
    $region17: #{tpu_custom_call.1} parent=1 // pred_fallthru
      _
    // Predicated region
    $region18: #{tpu_custom_call.1} parent=1 // pred_check
      _
    $region19: #{tpu_custom_call.1} parent=1 // pred_check_branch
      %26 = sbr.rel (0) target = $region21
    $region20: #{tpu_custom_call.1} parent=1 // pred_region
      _
    $region21: #{tpu_custom_call.1} parent=1 // pred_fallthru
      _
    // Predicated region
    $region22: #{tpu_custom_call.1} parent=1 // pred_check
      _
    $region23: #{tpu_custom_call.1} parent=1 // pred_check_branch
      %28 = sbr.rel (0) target = $region25
    $region24: #{tpu_custom_call.1} parent=1 // pred_region
      _
    $region25: #{tpu_custom_call.1} parent=1 // pred_fallthru
      _
    // Predicated region
    $region26: #{tpu_custom_call.1} parent=1 // pred_check
      _
    $region27: #{tpu_custom_call.1} parent=1 // pred_check_branch
      %30 = sbr.rel (0) target = $region29
    $region28: #{tpu_custom_call.1} parent=1 // pred_region
      _
    $region29: #{tpu_custom_call.1} parent=1 // pred_fallthru
      _
    // Predicated region
    $region30: #{tpu_custom_call.1} parent=1 // pred_check
      _
    $region31: #{tpu_custom_call.1} parent=1 // pred_check_branch
      %32 = sbr.rel (0) target = $region33
    $region32: #{tpu_custom_call.1} parent=1 // pred_region
      _
    $region33: #{tpu_custom_call.1} parent=1 // pred_fallthru
      _
    // Predicated region
    $region34: #{tpu_custom_call.1} parent=1 // pred_check
      _
    $region35: #{tpu_custom_call.1} parent=1 // pred_check_branch
      %34 = sbr.rel (0) target = $region37
    $region36: #{tpu_custom_call.1} parent=1 // pred_region
      _
    $region37: #{tpu_custom_call.1} parent=1 // pred_fallthru
      _
    %v35 = vld [vmem:[%s1] sm:$0xff]
    %v36 = vld [vmem:[%s1 + $0x8] sm:$0xff]
    %v37 = vld [vmem:[%s1 + $0x10] sm:$0xff]
    %v38 = vld [vmem:[%s1 + $0x18] sm:$0xff]
    %v39 = vld [vmem:[%s0] sm:$0xff]
    %v40 = vld [vmem:[%s2] sm:$0xff]
    %v41 = vld [vmem:[%s2 + $0x8] sm:$0xff]
    %v42 = vld [vmem:[%s2 + $0x10] sm:$0xff]
    %v43 = vld [vmem:[%s2 + $0x18] sm:$0xff]
    %45 = vset.pattern.permute.xlu0 0
    %46 = vperm.xlu0 %45, %v40
    %v47 = vpop.permute.xlu0 %46
    %50 = vset.pattern.permute.xlu0 0
    %51 = vperm.xlu0 %50, %v41
    %v52 = vpop.permute.xlu0 %51
    %55 = vset.pattern.permute.xlu0 0
    %56 = vperm.xlu0 %55, %v42
    %v57 = vpop.permute.xlu0 %56
    %60 = vset.pattern.permute.xlu0 0
    %61 = vperm.xlu0 %60, %v43
    %v62 = vpop.permute.xlu0 %61
    %vm64 = vcmask 89088
    %v66 = vsel %vm64, %v35, 0
    %v69 = vsel %vm64, %v36, 0
    %v72 = vsel %vm64, %v37, 0
    %v75 = vsel %vm64, %v38, 0
    %v78 = vsel %vm64, %v39, 0
    %80 = vmatprep.subr.mxu0 0.0
    %81 = vmatpush1.xpose.msra.mxu0 %v78
    %82 = vmatprep.subr.mxu0 0.0
    %83 = vmatpush1.xpose.msra.mxu0 0.0
    %84 = vmatprep.subr.mxu0 0.0
    %85 = vmatpush1.xpose.msra.mxu0 0.0
    %86 = vmatprep.subr.mxu0 0.0
    %87 = vmatpush1.xpose.msra.mxu0 0.0
    %88 = vmatprep.subr.mxu0 0.0
    %89 = vmatpush1.xpose.msra.mxu0 0.0
    %90 = vmatprep.subr.mxu0 0.0
    %91 = vmatpush1.xpose.msra.mxu0 0.0
    %92 = vmatprep.subr.mxu0 0.0
    %93 = vmatpush1.xpose.msra.mxu0 0.0
    %94 = vmatprep.subr.mxu0 0.0
    %95 = vmatpush1.xpose.msra.mxu0 0.0
    %96 = vmatprep.subr.mxu0 0.0
    %97 = vmatpush1.xpose.msra.mxu0 0.0
    %98 = vmatprep.subr.mxu0 0.0
    %99 = vmatpush1.xpose.msra.mxu0 0.0
    %100 = vmatprep.subr.mxu0 0.0
    %101 = vmatpush1.xpose.msra.mxu0 0.0
    %102 = vmatprep.subr.mxu0 0.0
    %103 = vmatpush1.xpose.msra.mxu0 0.0
    %104 = vmatprep.subr.mxu0 0.0
    %105 = vmatpush1.xpose.msra.mxu0 0.0
    %106 = vmatprep.subr.mxu0 0.0
    %107 = vmatpush1.xpose.msra.mxu0 0.0
    %108 = vmatprep.subr.mxu0 0.0
    %109 = vmatpush1.xpose.msra.mxu0 0.0
    %110 = vmatprep.subr.mxu0 0.0
    %111 = vmatpush1.xpose.msra.mxu0 0.0
    %112 = vmatprep.subr.mxu0 0.0
    %113 = vmatpush1.xpose.msra.mxu0 0.0
    %114 = vmatprep.subr.mxu0 0.0
    %115 = vmatpush1.xpose.msra.mxu0 0.0
    %116 = vmatprep.subr.mxu0 0.0
    %117 = vmatpush1.xpose.msra.mxu0 0.0
    %118 = vmatprep.subr.mxu0 0.0
    %119 = vmatpush1.xpose.msra.mxu0 0.0
    %120 = vmatprep.subr.mxu0 0.0
    %121 = vmatpush1.xpose.msra.mxu0 0.0
    %122 = vmatprep.subr.mxu0 0.0
    %123 = vmatpush1.xpose.msra.mxu0 0.0
    %124 = vmatprep.subr.mxu0 0.0
    %125 = vmatpush1.xpose.msra.mxu0 0.0
    %126 = vmatprep.subr.mxu0 0.0
    %127 = vmatpush1.xpose.msra.mxu0 0.0
    %128 = vmatprep.subr.mxu0 0.0
    %129 = vmatpush1.xpose.msra.mxu0 0.0
    %130 = vmatprep.subr.mxu0 0.0
    %131 = vmatpush1.xpose.msra.mxu0 0.0
    %132 = vmatprep.subr.mxu0 0.0
    %133 = vmatpush1.xpose.msra.mxu0 0.0
    %134 = vmatprep.subr.mxu0 0.0
    %135 = vmatpush1.xpose.msra.mxu0 0.0
    %136 = vmatprep.subr.mxu0 0.0
    %137 = vmatpush1.xpose.msra.mxu0 0.0
    %138 = vmatprep.subr.mxu0 0.0
    %139 = vmatpush1.xpose.msra.mxu0 0.0
    %140 = vmatprep.subr.mxu0 0.0
    %141 = vmatpush1.xpose.msra.mxu0 0.0
    %142 = vmatprep.subr.mxu0 0.0
    %143 = vmatpush1.xpose.msra.mxu0 0.0
    %144 = vmatprep.mubr.f32.mxu0 0.0
    %145 = vmatmul.mubr.f32.gmra.mrb[0].mxu0 %v66
    %v146 = vpop.f32.mrb[0].mxu0
    %v147 = vadd.f32 %v47, %v146
    %v148 = vpop.f32.mrb[0].mxu0
    %149 = vmatprep.mubr.f32.mxu0 0.0
    %150 = vmatmul.mubr.f32.gmra.mrb[0].mxu0 %v69
    %v151 = vpop.f32.mrb[0].mxu0
    %v152 = vadd.f32 %v52, %v151
    %v153 = vpop.f32.mrb[0].mxu0
    %154 = vmatprep.mubr.f32.mxu0 0.0
    %155 = vmatmul.mubr.f32.gmra.mrb[0].mxu0 %v72
    %v156 = vpop.f32.mrb[0].mxu0
    %v157 = vadd.f32 %v57, %v156
    %v158 = vpop.f32.mrb[0].mxu0
    %159 = vmatprep.mubr.f32.mxu0 0.0
    %160 = vmatmul.mubr.f32.gmra.mrb[0].mxu0 %v75
    %v161 = vpop.f32.mrb[0].mxu0
    %v162 = vadd.f32 %v62, %v161
    %v163 = vpop.f32.mrb[0].mxu0
    %164 = vdwg.mxu0
    %v165 = vmax.f32 %v147, 0.0
    %v166 = vmax.f32 %v152, 0.0
    %v167 = vmax.f32 %v157, 0.0
    %v168 = vmax.f32 %v162, 0.0
    %v169 = vld [vmem:[%s3] sm:$0xff]
    %v170 = vld [vmem:[%s3 + $0x8] sm:$0xff]
    %v171 = vld [vmem:[%s3 + $0x10] sm:$0xff]
    %v172 = vld [vmem:[%s3 + $0x18] sm:$0xff]
    %v173 = vld [vmem:[%s4] sm:$0xff]
    %v174 = vld [vmem:[%s4 + $0x8] sm:$0xff]
    %v175 = vld [vmem:[%s4 + $0x10] sm:$0xff]
    %v176 = vld [vmem:[%s4 + $0x18] sm:$0xff]
    %178 = vset.pattern.permute.xlu0 0
    %179 = vperm.xlu0 %178, %v173
    %v180 = vpop.permute.xlu0 %179
    %183 = vset.pattern.permute.xlu0 0
    %184 = vperm.xlu0 %183, %v174
    %v185 = vpop.permute.xlu0 %184
    %188 = vset.pattern.permute.xlu0 0
    %189 = vperm.xlu0 %188, %v175
    %v190 = vpop.permute.xlu0 %189
    %193 = vset.pattern.permute.xlu0 0
    %194 = vperm.xlu0 %193, %v176
    %v195 = vpop.permute.xlu0 %194
    %vm197 = vcmask 261120
    %v199 = vsel %vm197, %v169, 0
    %v202 = vsel %vm197, %v170, 0
    %v205 = vsel %vm197, %v171, 0
    %v208 = vsel %vm197, %v172, 0
    %210 = vmatprep.subr.mxu0 0.0
    %211 = vmatpush1.msra.mxu0 %v165
    %212 = vmatprep.subr.mxu0 0.0
    %213 = vmatpush1.msra.mxu0 %v166
    %214 = vmatprep.subr.mxu0 0.0
    %215 = vmatpush1.msra.mxu0 %v167
    %216 = vmatprep.subr.mxu0 0.0
    %217 = vmatpush1.msra.mxu0 %v168
    %218 = vmatprep.subr.mxu0 0.0
    %219 = vmatpush1.msra.mxu0 0.0
    %220 = vmatprep.subr.mxu0 0.0
    %221 = vmatpush1.msra.mxu0 0.0
    %222 = vmatprep.subr.mxu0 0.0
    %223 = vmatpush1.msra.mxu0 0.0
    %224 = vmatprep.subr.mxu0 0.0
    %225 = vmatpush1.msra.mxu0 0.0
    %226 = vmatprep.subr.mxu0 0.0
    %227 = vmatpush1.msra.mxu0 0.0
    %228 = vmatprep.subr.mxu0 0.0
    %229 = vmatpush1.msra.mxu0 0.0
    %230 = vmatprep.subr.mxu0 0.0
    %231 = vmatpush1.msra.mxu0 0.0
    %232 = vmatprep.subr.mxu0 0.0
    %233 = vmatpush1.msra.mxu0 0.0
    %234 = vmatprep.subr.mxu0 0.0
    %235 = vmatpush1.msra.mxu0 0.0
    %236 = vmatprep.subr.mxu0 0.0
    %237 = vmatpush1.msra.mxu0 0.0
    %238 = vmatprep.subr.mxu0 0.0
    %239 = vmatpush1.msra.mxu0 0.0
    %240 = vmatprep.subr.mxu0 0.0
    %241 = vmatpush1.msra.mxu0 0.0
    %242 = vmatprep.subr.mxu0 0.0
    %243 = vmatpush1.msra.mxu0 0.0
    %244 = vmatprep.subr.mxu0 0.0
    %245 = vmatpush1.msra.mxu0 0.0
    %246 = vmatprep.subr.mxu0 0.0
    %247 = vmatpush1.msra.mxu0 0.0
    %248 = vmatprep.subr.mxu0 0.0
    %249 = vmatpush1.msra.mxu0 0.0
    %250 = vmatprep.subr.mxu0 0.0
    %251 = vmatpush1.msra.mxu0 0.0
    %252 = vmatprep.subr.mxu0 0.0
    %253 = vmatpush1.msra.mxu0 0.0
    %254 = vmatprep.subr.mxu0 0.0
    %255 = vmatpush1.msra.mxu0 0.0
    %256 = vmatprep.subr.mxu0 0.0
    %257 = vmatpush1.msra.mxu0 0.0
    %258 = vmatprep.subr.mxu0 0.0
    %259 = vmatpush1.msra.mxu0 0.0
    %260 = vmatprep.subr.mxu0 0.0
    %261 = vmatpush1.msra.mxu0 0.0
    %262 = vmatprep.subr.mxu0 0.0
    %263 = vmatpush1.msra.mxu0 0.0
    %264 = vmatprep.subr.mxu0 0.0
    %265 = vmatpush1.msra.mxu0 0.0
    %266 = vmatprep.subr.mxu0 0.0
    %267 = vmatpush1.msra.mxu0 0.0
    %268 = vmatprep.subr.mxu0 0.0
    %269 = vmatpush1.msra.mxu0 0.0
    %270 = vmatprep.subr.mxu0 0.0
    %271 = vmatpush1.msra.mxu0 0.0
    %272 = vmatprep.subr.mxu0 0.0
    %273 = vmatpush1.msra.mxu0 0.0
    %274 = vmatprep.mubr.f32.mxu0 0.0
    %275 = vmatmul.mubr.f32.gmra.mrb[0].mxu0 %v199
    %v276 = vpop.f32.mrb[0].mxu0
    %v277 = vadd.f32 %v180, %v276
    %v278 = vpop.f32.mrb[0].mxu0
    %279 = vmatprep.mubr.f32.mxu0 0.0
    %280 = vmatmul.mubr.f32.gmra.mrb[0].mxu0 %v202
    %v281 = vpop.f32.mrb[0].mxu0
    %v282 = vadd.f32 %v185, %v281
    %v283 = vpop.f32.mrb[0].mxu0
    %284 = vmatprep.mubr.f32.mxu0 0.0
    %285 = vmatmul.mubr.f32.gmra.mrb[0].mxu0 %v205
    %v286 = vpop.f32.mrb[0].mxu0
    %v287 = vadd.f32 %v190, %v286
    %v288 = vpop.f32.mrb[0].mxu0
    %289 = vmatprep.mubr.f32.mxu0 0.0
    %290 = vmatmul.mubr.f32.gmra.mrb[0].mxu0 %v208
    %v291 = vpop.f32.mrb[0].mxu0
    %v292 = vadd.f32 %v195, %v291
    %v293 = vpop.f32.mrb[0].mxu0
    %294 = vdwg.mxu0
    %v295 = vmax.f32 %v277, 0.0
    %v296 = vmax.f32 %v282, 0.0
    %v297 = vmax.f32 %v287, 0.0
    %v298 = vmax.f32 %v292, 0.0
    %v299 = vld [vmem:[%s5] sm:$0xff]
    %v300 = vld [vmem:[%s5 + $0x8] sm:$0xff]
    %v301 = vld [vmem:[%s5 + $0x10] sm:$0xff]
    %v302 = vld [vmem:[%s5 + $0x18] sm:$0xff]
    %v303 = vld [vmem:[%s6] sm:$0xff]
    %v304 = vld [vmem:[%s6 + $0x8] sm:$0xff]
    %v305 = vld [vmem:[%s6 + $0x10] sm:$0xff]
    %v306 = vld [vmem:[%s6 + $0x18] sm:$0xff]
    %308 = vset.pattern.permute.xlu0 0
    %309 = vperm.xlu0 %308, %v303
    %v310 = vpop.permute.xlu0 %309
    %313 = vset.pattern.permute.xlu0 0
    %314 = vperm.xlu0 %313, %v304
    %v315 = vpop.permute.xlu0 %314
    %318 = vset.pattern.permute.xlu0 0
    %319 = vperm.xlu0 %318, %v305
    %v320 = vpop.permute.xlu0 %319
    %323 = vset.pattern.permute.xlu0 0
    %324 = vperm.xlu0 %323, %v306
    %v325 = vpop.permute.xlu0 %324
    %v328 = vsel %vm197, %v299, 0
    %v331 = vsel %vm197, %v300, 0
    %v334 = vsel %vm197, %v301, 0
    %v337 = vsel %vm197, %v302, 0
    %339 = vmatprep.subr.mxu0 0.0
    %340 = vmatpush1.msra.mxu0 %v295
    %341 = vmatprep.subr.mxu0 0.0
    %342 = vmatpush1.msra.mxu0 %v296
    %343 = vmatprep.subr.mxu0 0.0
    %344 = vmatpush1.msra.mxu0 %v297
    %345 = vmatprep.subr.mxu0 0.0
    %346 = vmatpush1.msra.mxu0 %v298
    %347 = vmatprep.subr.mxu0 0.0
    %348 = vmatpush1.msra.mxu0 0.0
    %349 = vmatprep.subr.mxu0 0.0
    %350 = vmatpush1.msra.mxu0 0.0
    %351 = vmatprep.subr.mxu0 0.0
    %352 = vmatpush1.msra.mxu0 0.0
    %353 = vmatprep.subr.mxu0 0.0
    %354 = vmatpush1.msra.mxu0 0.0
    %355 = vmatprep.subr.mxu0 0.0
    %356 = vmatpush1.msra.mxu0 0.0
    %357 = vmatprep.subr.mxu0 0.0
    %358 = vmatpush1.msra.mxu0 0.0
    %359 = vmatprep.subr.mxu0 0.0
    %360 = vmatpush1.msra.mxu0 0.0
    %361 = vmatprep.subr.mxu0 0.0
    %362 = vmatpush1.msra.mxu0 0.0
    %363 = vmatprep.subr.mxu0 0.0
    %364 = vmatpush1.msra.mxu0 0.0
    %365 = vmatprep.subr.mxu0 0.0
    %366 = vmatpush1.msra.mxu0 0.0
    %367 = vmatprep.subr.mxu0 0.0
    %368 = vmatpush1.msra.mxu0 0.0
    %369 = vmatprep.subr.mxu0 0.0
    %370 = vmatpush1.msra.mxu0 0.0
    %371 = vmatprep.subr.mxu0 0.0
    %372 = vmatpush1.msra.mxu0 0.0
    %373 = vmatprep.subr.mxu0 0.0
    %374 = vmatpush1.msra.mxu0 0.0
    %375 = vmatprep.subr.mxu0 0.0
    %376 = vmatpush1.msra.mxu0 0.0
    %377 = vmatprep.subr.mxu0 0.0
    %378 = vmatpush1.msra.mxu0 0.0
    %379 = vmatprep.subr.mxu0 0.0
    %380 = vmatpush1.msra.mxu0 0.0
    %381 = vmatprep.subr.mxu0 0.0
    %382 = vmatpush1.msra.mxu0 0.0
    %383 = vmatprep.subr.mxu0 0.0
    %384 = vmatpush1.msra.mxu0 0.0
    %385 = vmatprep.subr.mxu0 0.0
    %386 = vmatpush1.msra.mxu0 0.0
    %387 = vmatprep.subr.mxu0 0.0
    %388 = vmatpush1.msra.mxu0 0.0
    %389 = vmatprep.subr.mxu0 0.0
    %390 = vmatpush1.msra.mxu0 0.0
    %391 = vmatprep.subr.mxu0 0.0
    %392 = vmatpush1.msra.mxu0 0.0
    %393 = vmatprep.subr.mxu0 0.0
    %394 = vmatpush1.msra.mxu0 0.0
    %395 = vmatprep.subr.mxu0 0.0
    %396 = vmatpush1.msra.mxu0 0.0
    %397 = vmatprep.subr.mxu0 0.0
    %398 = vmatpush1.msra.mxu0 0.0
    %399 = vmatprep.subr.mxu0 0.0
    %400 = vmatpush1.msra.mxu0 0.0
    %401 = vmatprep.subr.mxu0 0.0
    %402 = vmatpush1.msra.mxu0 0.0
    %403 = vmatprep.mubr.f32.mxu0 0.0
    %404 = vmatmul.mubr.f32.gmra.mrb[0].mxu0 %v328
    %v405 = vpop.f32.mrb[0].mxu0
    %v406 = vadd.f32 %v310, %v405
    %v407 = vpop.f32.mrb[0].mxu0
    %408 = vmatprep.mubr.f32.mxu0 0.0
    %409 = vmatmul.mubr.f32.gmra.mrb[0].mxu0 %v331
    %v410 = vpop.f32.mrb[0].mxu0
    %v411 = vadd.f32 %v315, %v410
    %v412 = vpop.f32.mrb[0].mxu0
    %413 = vmatprep.mubr.f32.mxu0 0.0
    %414 = vmatmul.mubr.f32.gmra.mrb[0].mxu0 %v334
    %v415 = vpop.f32.mrb[0].mxu0
    %v416 = vadd.f32 %v320, %v415
    %v417 = vpop.f32.mrb[0].mxu0
    %418 = vmatprep.mubr.f32.mxu0 0.0
    %419 = vmatmul.mubr.f32.gmra.mrb[0].mxu0 %v337
    %v420 = vpop.f32.mrb[0].mxu0
    %v421 = vadd.f32 %v325, %v420
    %v422 = vpop.f32.mrb[0].mxu0
    %423 = vdwg.mxu0
    %v424 = vmax.f32 %v406, 0.0
    %v425 = vmax.f32 %v411, 0.0
    %v426 = vmax.f32 %v416, 0.0
    %v427 = vmax.f32 %v421, 0.0
    %v428 = vld [vmem:[%s7] sm:$0x1]
    %v429 = vld [vmem:[#allocation2] sm:$0x1]
    %431 = vset.pattern.permute.xlu0 0
    %432 = vperm.xlu0 %431, %v429
    %v433 = vpop.permute.xlu0 %432
    %v435 = vlaneseq
    %v436 = vshrl.u32 %v435, 7
    %v437 = vsub.s32 0, %v436
    %v438 = vrot.slane %v433, %v437
    %v440 = vsel %vm197, %v428, 0
    %442 = vmatprep.subr.mxu0 0.0
    %443 = vmatpush1.msra.mxu0 %v424
    %444 = vmatprep.subr.mxu0 0.0
    %445 = vmatpush1.msra.mxu0 %v425
    %446 = vmatprep.subr.mxu0 0.0
    %447 = vmatpush1.msra.mxu0 %v426
    %448 = vmatprep.subr.mxu0 0.0
    %449 = vmatpush1.msra.mxu0 %v427
    %450 = vmatprep.subr.mxu0 0.0
    %451 = vmatpush1.msra.mxu0 0.0
    %452 = vmatprep.subr.mxu0 0.0
    %453 = vmatpush1.msra.mxu0 0.0
    %454 = vmatprep.subr.mxu0 0.0
    %455 = vmatpush1.msra.mxu0 0.0
    %456 = vmatprep.subr.mxu0 0.0
    %457 = vmatpush1.msra.mxu0 0.0
    %458 = vmatprep.subr.mxu0 0.0
    %459 = vmatpush1.msra.mxu0 0.0
    %460 = vmatprep.subr.mxu0 0.0
    %461 = vmatpush1.msra.mxu0 0.0
    %462 = vmatprep.subr.mxu0 0.0
    %463 = vmatpush1.msra.mxu0 0.0
    %464 = vmatprep.subr.mxu0 0.0
    %465 = vmatpush1.msra.mxu0 0.0
    %466 = vmatprep.subr.mxu0 0.0
    %467 = vmatpush1.msra.mxu0 0.0
    %468 = vmatprep.subr.mxu0 0.0
    %469 = vmatpush1.msra.mxu0 0.0
    %470 = vmatprep.subr.mxu0 0.0
    %471 = vmatpush1.msra.mxu0 0.0
    %472 = vmatprep.subr.mxu0 0.0
    %473 = vmatpush1.msra.mxu0 0.0
    %474 = vmatprep.subr.mxu0 0.0
    %475 = vmatpush1.msra.mxu0 0.0
    %476 = vmatprep.subr.mxu0 0.0
    %477 = vmatpush1.msra.mxu0 0.0
    %478 = vmatprep.subr.mxu0 0.0
    %479 = vmatpush1.msra.mxu0 0.0
    %480 = vmatprep.subr.mxu0 0.0
    %481 = vmatpush1.msra.mxu0 0.0
    %482 = vmatprep.subr.mxu0 0.0
    %483 = vmatpush1.msra.mxu0 0.0
    %484 = vmatprep.subr.mxu0 0.0
    %485 = vmatpush1.msra.mxu0 0.0
    %486 = vmatprep.subr.mxu0 0.0
    %487 = vmatpush1.msra.mxu0 0.0
    %488 = vmatprep.subr.mxu0 0.0
    %489 = vmatpush1.msra.mxu0 0.0
    %490 = vmatprep.subr.mxu0 0.0
    %491 = vmatpush1.msra.mxu0 0.0
    %492 = vmatprep.subr.mxu0 0.0
    %493 = vmatpush1.msra.mxu0 0.0
    %494 = vmatprep.subr.mxu0 0.0
    %495 = vmatpush1.msra.mxu0 0.0
    %496 = vmatprep.subr.mxu0 0.0
    %497 = vmatpush1.msra.mxu0 0.0
    %498 = vmatprep.subr.mxu0 0.0
    %499 = vmatpush1.msra.mxu0 0.0
    %500 = vmatprep.subr.mxu0 0.0
    %501 = vmatpush1.msra.mxu0 0.0
    %502 = vmatprep.subr.mxu0 0.0
    %503 = vmatpush1.msra.mxu0 0.0
    %504 = vmatprep.subr.mxu0 0.0
    %505 = vmatpush1.msra.mxu0 0.0
    %506 = vmatprep.mubr.f32.mxu0 0.0
    %507 = vmatmul.mubr.f32.gmra.mrb[0].mxu0 %v440
    %v508 = vpop.f32.mrb[0].mxu0
    %v509 = vadd.f32 %v438, %v508
    %v510 = vpop.f32.mrb[0].mxu0
    %511 = vdwg.mxu0
    %vm512 = vcmask 57344
    %513 = vst.msk [vmem:[#allocation3] sm:$0x1] %vm512, %v509
    // Predicated region
    $region38: #{tpu_custom_call.1} parent=1 // pred_check
      _
    $region39: #{tpu_custom_call.1} parent=1 // pred_check_branch
      %515 = sbr.rel (0) target = $region41
    $region40: #{tpu_custom_call.1} parent=1 // pred_region
      %s517 = ssub.s32 16, 16
      %518 = vsyncadd [#allocation4], %s517
      %s520 = sshll.u32 [#allocation3], 4
      %s521 = int_to_ptr.vmem [resolvable:$true] %s520
      %523 = dma.vmem_to_hbm [thread:$0]  %s521, 16, %s9, [#allocation4]
    $region41: #{tpu_custom_call.1} parent=1 // pred_fallthru
      _
    // Predicated region
    $region42: #{tpu_custom_call.1} parent=1 // pred_check
      _
    $region43: #{tpu_custom_call.1} parent=1 // pred_check_branch
      %525 = sbr.rel (0) target = $region45
    $region44: #{tpu_custom_call.1} parent=1 // pred_region
      %526 = dma.done [#allocation4], 16
    $region45: #{tpu_custom_call.1} parent=1 // pred_fallthru
      _
    %527 = vsyncpa [#allocation4], 1

</llo_original>
